<compile_context>
chip_gen: v7x
topology: tpu7x:2x2x1
jax: 0.10.0
libtpu: 0.0.40
codegen_flags: <defaults>
</compile_context>

<pallas_src>
import functools

import jax
import jax.numpy as jnp
from jax.experimental import pallas as pl
from jax.experimental.pallas import tpu as pltpu


# ------------------------------ kernels ------------------------------------ #
# Channel axis is the second-to-last axis of every block; works for both the
# (C, T) per-image block and the (B, C, T) batch-folded block.

def _ln_withbias_kernel(x_ref, w_ref, b_ref, o_ref, *, eps: float):
    x = x_ref[...].astype(jnp.float32)               # (..., C, T)
    w = w_ref[...].astype(jnp.float32)               # (C, 1)
    b = b_ref[...].astype(jnp.float32)               # (C, 1)
    inv_c = 1.0 / x.shape[-2]

    mu = jnp.sum(x, axis=-2, keepdims=True) * inv_c          # sublane reduce
    xc = x - mu
    var = jnp.sum(xc * xc, axis=-2, keepdims=True) * inv_c   # two-pass variance
    inv = jax.lax.rsqrt(var + eps)

    o_ref[...] = (xc * inv * w + b).astype(o_ref.dtype)


def _ln_biasfree_kernel(x_ref, w_ref, o_ref, *, eps: float):
    x = x_ref[...].astype(jnp.float32)               # (..., C, T)
    w = w_ref[...].astype(jnp.float32)               # (C, 1)
    inv_c = 1.0 / x.shape[-2]

    mu = jnp.sum(x, axis=-2, keepdims=True) * inv_c
    xc = x - mu
    var = jnp.sum(xc * xc, axis=-2, keepdims=True) * inv_c
    inv = jax.lax.rsqrt(var + eps)

    # DELIBERATE (Restormer BiasFree_LayerNorm): variance uses the mean, but
    # the output is NOT mean-centered. Do not "fix" this.
    o_ref[...] = (x * inv * w).astype(o_ref.dtype)


# ------------------------------ wrapper ------------------------------------ #

def _round_up(x: int, m: int) -> int:
    return -(-x // m) * m


def _vmem_policy():
    """(working-set budget, scoped vmem_limit_bytes), sized per generation."""
    try:
        cap = int(pltpu.get_tpu_info().vmem_capacity_bytes)
    except Exception:
        cap = 128 << 20
    if cap <= (64 << 20):           # v7x-class: 64 MiB physical VMEM
        budget = 24 << 20
    else:                           # v5e / v6e: 128 MiB physical VMEM
        budget = 40 << 20
    limit = min(cap - (8 << 20), budget + (24 << 20))
    return budget, limit


def _pick_tile_hw(hw: int, rows: int, itemsize: int, budget: int, *,
                  max_tile: int = 16384, min_tiles: int = 1) -> int:
    """Largest lane tile (multiple of 128, or full hw) within the VMEM budget.

    `rows` = number of sublane rows per block (c, or b*c when batch-folded).
    Budget counts the double-buffered HBM-dtype in/out blocks PLUS the
    in-kernel f32 working set created by the upcast.
    """
    def step_bytes(t):
        hbm = 4 * rows * t * itemsize     # in + out blocks, double-buffered
        f32 = 3 * rows * t * 4            # x, x-mu, y in f32 vreg/scratch
        return hbm + f32

    full_ok = (hw <= max_tile) and (step_bytes(hw) <= budget)
    if min_tiles <= 1 and full_ok:
        return hw
    if min_tiles > 1 and hw > 128:
        # Split hw so the grid has >= min_tiles steps (v7x: feed both TCs).
        t = _round_up(-(-hw // min_tiles), 128)
        if t < hw and step_bytes(t) <= budget:
            return t
        if full_ok:
            return hw
    t = max(128, (min(max_tile, hw) // 128) * 128)
    while t > 128 and step_bytes(t) > budget:
        t -= 128
    return t


def layernorm_nchw(x, weight, bias=None, *, layernorm_type: str = "WithBias",
                   eps: float = 1e-5, max_tile_hw: int = 16384):
    """Forward pass of LayerNorm(dim, LayerNorm_type) on NCHW input."""
    b, c, h, w = x.shape
    hw = h * w
    itemsize = jnp.dtype(x.dtype).itemsize
    bias_free = (layernorm_type == "BiasFree")

    x3 = x.reshape(b, c, hw)                         # free view, no transpose
    w2 = weight.reshape(c, 1)

    budget, vmem_limit = _vmem_policy()

    # Small-channel configs: fold batch into the block so each grid step
    # moves a useful amount of HBM traffic (otherwise per-step overhead wins).
    fold_batch = (
        b > 1
        and c * hw * itemsize <= (512 << 10)
        and (4 * b * c * 128 * itemsize + 3 * b * c * 128 * 4) <= budget
    )

    rows = b * c if fold_batch else c
    # Guarantee >= 2 total grid steps where possible (v7x has 2 TensorCores).
    single_batch_axis = 1 if fold_batch else b
    min_tiles = 2 if (single_batch_axis < 2 and hw >= 256) else 1

    tile = _pick_tile_hw(hw, rows, itemsize, budget,
                         max_tile=max_tile_hw, min_tiles=min_tiles)
    n_tiles = pl.cdiv(hw, tile)     # partial edge block -> masked stores

    if fold_batch:
        grid = (n_tiles,)
        x_spec = pl.BlockSpec((b, c, tile), lambda ti: (0, 0, ti))
        p_spec = pl.BlockSpec((c, 1), lambda ti: (0, 0))
        o_spec = pl.BlockSpec((b, c, tile), lambda ti: (0, 0, ti))
        dims = ("parallel",)
    else:
        grid = (b, n_tiles)
        x_spec = pl.BlockSpec((pl.Squeezed(), c, tile), lambda bi, ti: (bi, 0, ti))
        p_spec = pl.BlockSpec((c, 1), lambda bi, ti: (0, 0))
        o_spec = pl.BlockSpec((pl.Squeezed(), c, tile), lambda bi, ti: (bi, 0, ti))
        dims = ("parallel", "parallel")

    if bias_free:
        kernel = functools.partial(_ln_biasfree_kernel, eps=eps)
        in_specs = [x_spec, p_spec]
        args = (x3, w2)
        param_bytes = w2.size * jnp.dtype(w2.dtype).itemsize
    else:
        kernel = functools.partial(_ln_withbias_kernel, eps=eps)
        in_specs = [x_spec, p_spec, p_spec]
        b2 = (jnp.zeros((c,), x.dtype) if bias is None else bias).reshape(c, 1)
        args = (x3, w2, b2)
        param_bytes = (w2.size * jnp.dtype(w2.dtype).itemsize
                       + b2.size * jnp.dtype(b2.dtype).itemsize)

    cost = pl.CostEstimate(
        flops=8 * b * c * hw,
        transcendentals=b * hw,
        bytes_accessed=2 * b * c * hw * itemsize + param_bytes,
    )

    out = pl.pallas_call(
        kernel,
        out_shape=jax.ShapeDtypeStruct((b, c, hw), x.dtype),
        grid_spec=pltpu.PrefetchScalarGridSpec(
            num_scalar_prefetch=0,
            grid=grid,
            in_specs=in_specs,
            out_specs=o_spec,
        ),
        compiler_params=pltpu.CompilerParams(
            dimension_semantics=dims,
            vmem_limit_bytes=vmem_limit),
        cost_estimate=cost,
    )(*args)

    return out.reshape(b, c, h, w)


# ------------------------------ reference ---------------------------------- #

def _reference_nchw(x, weight, bias, layernorm_type, eps=1e-5):
    b, c, h, w = x.shape
    x3 = jnp.transpose(x, (0, 2, 3, 1)).reshape(b, h * w, c).astype(jnp.float32)
    mu = jnp.mean(x3, axis=-1, keepdims=True)
    var = jnp.mean((x3 - mu) ** 2, axis=-1, keepdims=True)
    wf = weight.astype(jnp.float32)
    if layernorm_type == "BiasFree":
        y = x3 / jnp.sqrt(var + eps) * wf
    else:
        y = (x3 - mu) / jnp.sqrt(var + eps) * wf + bias.astype(jnp.float32)
    return jnp.transpose(y.reshape(b, h, w, c), (0, 3, 1, 2)).astype(x.dtype)


# -------------------------------- main -------------------------------------- #

if __name__ == "__main__":
    key = jax.random.PRNGKey(0)
    ok = True

    # 1) Primary shape implied by the module spec (batch-folded small-C path).
    B, C, H, W = 2, 4, 16, 16
    x = jax.random.normal(key, (B, C, H, W), dtype=jnp.float32)
    weight = jnp.ones((C,), dtype=jnp.float32)   # nn.Parameter(torch.ones)
    bias = jnp.zeros((C,), dtype=jnp.float32)    # nn.Parameter(torch.zeros)
    for ln_type in ("WithBias", "BiasFree"):
        out = jax.block_until_ready(
            layernorm_nchw(x, weight, bias, layernorm_type=ln_type))
        ref = _reference_nchw(x, weight, bias, ln_type)
        ok &= bool(jnp.allclose(out, ref, atol=1e-5, rtol=1e-5))
        ok &= (out.shape == (B, C, H, W))

    # 2) Non-128-multiple spatial extent (full-hw block path) + real params.
    k1, k2, k3 = jax.random.split(key, 3)
    B2, C2, H2, W2 = 1, 48, 6, 10
    x2 = jax.random.normal(k1, (B2, C2, H2, W2), dtype=jnp.float32)
    w2 = jax.random.normal(k2, (C2,), dtype=jnp.float32)
    b2 = jax.random.normal(k3, (C2,), dtype=jnp.float32)
    for ln_type in ("WithBias", "BiasFree"):
        out = jax.block_until_ready(
            layernorm_nchw(x2, w2, b2, layernorm_type=ln_type))
        ref = _reference_nchw(x2, w2, b2, ln_type)
        ok &= bool(jnp.allclose(out, ref, atol=1e-4, rtol=1e-4))
        ok &= (out.shape == (B2, C2, H2, W2))

    # 3) Partial edge-block path (hw % tile != 0), tile capped to force it.
    B3, C3, H3, W3 = 1, 8, 10, 20                 # hw=200 -> tile=128 -> 2 blocks
    x3 = jax.random.normal(k1, (B3, C3, H3, W3), dtype=jnp.float32)
    w3 = jnp.ones((C3,), dtype=jnp.float32)
    b3 = jnp.zeros((C3,), dtype=jnp.float32)
    out = jax.block_until_ready(
        layernorm_nchw(x3, w3, b3, layernorm_type="WithBias", max_tile_hw=128))
    ref = _reference_nchw(x3, w3, b3, "WithBias")
    ok &= bool(jnp.allclose(out, ref, atol=1e-5, rtol=1e-5))

    # 4) b == 1 with hw >= 256: exercises the forced >=2-tile split (v7x TCs).
    B4, C4, H4, W4 = 1, 16, 16, 32
    x4 = jax.random.normal(k2, (B4, C4, H4, W4), dtype=jnp.float32)
    w4 = jax.random.normal(k3, (C4,), dtype=jnp.float32)
    out = jax.block_until_ready(
        layernorm_nchw(x4, w4, None, layernorm_type="BiasFree"))
    ref = _reference_nchw(x4, w4, None, "BiasFree")
    ok &= bool(jnp.allclose(out, ref, atol=1e-4, rtol=1e-4))

    # 5) bf16 HBM dtype (f32 math in-kernel).
    x5 = jax.random.normal(k3, (B, C, H, W), dtype=jnp.bfloat16)
    out = jax.block_until_ready(
        layernorm_nchw(x5, weight, bias, layernorm_type="WithBias"))
    ref = _reference_nchw(x5, weight, bias, "WithBias")
    ok &= bool(jnp.allclose(out.astype(jnp.float32), ref.astype(jnp.float32),
                            atol=2e-2, rtol=2e-2))

    if ok:
        print("KERNEL_OK")
    else:
        raise SystemExit("mismatch vs reference")
</pallas_src>

<mosaic_0001>
module attributes {stable_mosaic.version = 11 : i64} {
  func.func @_ln_withbias_kernel(%arg0: i32, %arg1: memref<2x4x128xf32, #tpu.memory_space<vmem>>, %arg2: memref<4x1xf32, #tpu.memory_space<vmem>>, %arg3: memref<4x1xf32, #tpu.memory_space<vmem>>, %arg4: memref<2x4x128xf32, #tpu.memory_space<vmem>>) attributes {dimension_semantics = [#tpu.dimension_semantics<parallel>], iteration_bounds = array<i64: 2>, scalar_prefetch = 0 : i64, scratch_operands = 0 : i64, tpu.core_type = #tpu.core_type<tc>, window_params = [{transform_indices = @transform_0, window_bounds = array<i64: 2, 4, 128>}, {pipeline_mode = #tpu.pipeline_mode<synchronous>, transform_indices = @transform_1, window_bounds = array<i64: 4, 1>}, {pipeline_mode = #tpu.pipeline_mode<synchronous>, transform_indices = @transform_2, window_bounds = array<i64: 4, 1>}, {transform_indices = @transform_3, window_bounds = array<i64: 2, 4, 128>}]} {
    %c0 = arith.constant 0 : index
    %c0_0 = arith.constant 0 : index
    %c0_1 = arith.constant 0 : index
    %0 = vector.load %arg1[%c0, %c0_0, %c0_1] : memref<2x4x128xf32, #tpu.memory_space<vmem>>, vector<2x4x128xf32>
    %c0_2 = arith.constant 0 : index
    %c0_3 = arith.constant 0 : index
    %1 = vector.load %arg2[%c0_2, %c0_3] : memref<4x1xf32, #tpu.memory_space<vmem>>, vector<4x1xf32>
    %c0_4 = arith.constant 0 : index
    %c0_5 = arith.constant 0 : index
    %2 = vector.load %arg3[%c0_4, %c0_5] : memref<4x1xf32, #tpu.memory_space<vmem>>, vector<4x1xf32>
    %cst = arith.constant dense<0.000000e+00> : vector<2x128xf32>
    %3 = vector.multi_reduction <add>, %0, %cst [1] : vector<2x4x128xf32> to vector<2x128xf32>
    %4 = vector.shape_cast %3 : vector<2x128xf32> to vector<2x1x128xf32>
    %cst_6 = arith.constant 2.500000e-01 : f32
    %5 = vector.broadcast %cst_6 : f32 to vector<2x1x128xf32>
    %6 = arith.mulf %4, %5 : vector<2x1x128xf32>
    %7 = vector.broadcast %6 : vector<2x1x128xf32> to vector<2x4x128xf32>
    %8 = arith.subf %0, %7 : vector<2x4x128xf32>
    %9 = arith.mulf %8, %8 : vector<2x4x128xf32>
    %cst_7 = arith.constant dense<0.000000e+00> : vector<2x128xf32>
    %10 = vector.multi_reduction <add>, %9, %cst_7 [1] : vector<2x4x128xf32> to vector<2x128xf32>
    %11 = vector.shape_cast %10 : vector<2x128xf32> to vector<2x1x128xf32>
    %cst_8 = arith.constant 2.500000e-01 : f32
    %12 = vector.broadcast %cst_8 : f32 to vector<2x1x128xf32>
    %13 = arith.mulf %11, %12 : vector<2x1x128xf32>
    %cst_9 = arith.constant 9.99999974E-6 : f32
    %14 = vector.broadcast %cst_9 : f32 to vector<2x1x128xf32>
    %15 = arith.addf %13, %14 : vector<2x1x128xf32>
    %16 = math.rsqrt %15 : vector<2x1x128xf32>
    %17 = vector.broadcast %16 : vector<2x1x128xf32> to vector<2x4x128xf32>
    %18 = arith.mulf %8, %17 : vector<2x4x128xf32>
    %19 = vector.shape_cast %1 : vector<4x1xf32> to vector<1x4x1xf32>
    %20 = vector.broadcast %19 : vector<1x4x1xf32> to vector<2x4x128xf32>
    %21 = arith.mulf %18, %20 : vector<2x4x128xf32>
    %22 = vector.shape_cast %2 : vector<4x1xf32> to vector<1x4x1xf32>
    %23 = vector.broadcast %22 : vector<1x4x1xf32> to vector<2x4x128xf32>
    %24 = arith.addf %21, %23 : vector<2x4x128xf32>
    %c0_10 = arith.constant 0 : index
    %c0_11 = arith.constant 0 : index
    %c0_12 = arith.constant 0 : index
    %25 = vector.load %arg4[%c0_10, %c0_11, %c0_12] : memref<2x4x128xf32, #tpu.memory_space<vmem>>, vector<2x4x128xf32>
    tpu.vector_store %arg4[%c0_10, %c0_11, %c0_12], %24 {strides = array<i32>} : memref<2x4x128xf32, #tpu.memory_space<vmem>>, vector<2x4x128xf32>,
    return
  }
  func.func @transform_0(%arg0: i32) -> (i32, i32, i32) {
    %c0_i32 = arith.constant 0 : i32
    %c0_i32_0 = arith.constant 0 : i32
    %c0_i32_1 = arith.constant 0 : i32
    return %c0_i32, %c0_i32_0, %arg0 : i32, i32, i32
  }
  func.func @transform_1(%arg0: i32) -> (i32, i32) {
    %c0_i32 = arith.constant 0 : i32
    %c0_i32_0 = arith.constant 0 : i32
    %c0_i32_1 = arith.constant 0 : i32
    return %c0_i32, %c0_i32_0 : i32, i32
  }
  func.func @transform_2(%arg0: i32) -> (i32, i32) {
    %c0_i32 = arith.constant 0 : i32
    %c0_i32_0 = arith.constant 0 : i32
    %c0_i32_1 = arith.constant 0 : i32
    return %c0_i32, %c0_i32_0 : i32, i32
  }
  func.func @transform_3(%arg0: i32) -> (i32, i32, i32) {
    %c0_i32 = arith.constant 0 : i32
    %c0_i32_0 = arith.constant 0 : i32
    %c0_i32_1 = arith.constant 0 : i32
    return %c0_i32, %c0_i32_0, %arg0 : i32, i32, i32
  }
}

</mosaic_0001>

<llo_original>
// kernel: tpu_custom_call.1
$region0: #{tpu_custom_call.1}
  #allocation0 [shape = 'u32[]', space=smem, size = 0x4, offset = 0x4, fixed_abs, tag = 'smem constant byte address 0x4 - core index']
  #allocation1 [shape = 'u32[144,128]{1,0:T(1,128)}', space=vmem, size = 0x12000, scoped, tag = 'internal scratch']
  %s0 = inlined_call_operand.hbm [shape: f32[2,4,256], index: 0, kind: input, shape index: {}]
  %s1 = inlined_call_operand.hbm [shape: f32[4,1], index: 1, kind: input, shape index: {}]
  %s2 = inlined_call_operand.hbm [shape: f32[4,1], index: 2, kind: input, shape index: {}]
  %s3 = inlined_call_operand.hbm [shape: f32[2,4,256], index: 3, kind: output, shape index: {}]
  %s4 = sld [smem:[#allocation0]]
  $region57: #{tpu_custom_call.1} parent=0
    _
  %s6 = ssub.s32 1, %s4
  %s7 = scalar_select 0, %s6, %s4
  $region1: #{tpu_custom_call.1} parent=0
    #allocation2 [shape = 'u8[8192]{0}', space=vmem, size = 0x2000, scoped, tag = 'input window, operand 0']
    #allocation3 [shape = 's32[2]{0}', space=sflag, size = 0x8, scoped, tag = 'scoped memory for tpu_custom_call.1']
    #allocation4 [shape = 's32[2]{0}', space=sflag, size = 0x8, scoped, tag = 'scoped memory for tpu_custom_call.1']
    #allocation5 [shape = 'u8[2048]{0}', space=vmem, size = 0x800, scoped, tag = 'input window, operand 1, single buffered']
    #allocation6 [shape = 's32[1]{0}', space=sflag, size = 0x4, scoped, tag = 'scoped memory for tpu_custom_call.1']
    #allocation7 [shape = 'u8[2048]{0}', space=vmem, size = 0x800, scoped, tag = 'input window, operand 2, single buffered']
    #allocation8 [shape = 'u8[8192]{0}', space=vmem, size = 0x2000, scoped, tag = 'output window, operand 0']
    %8 = vsyncpa [#allocation3], 0
    %s9 = scalar_lea.sflag [#allocation3], 1
    %10 = vsyncpa %s9, 0
    %11 = vsyncpa [#allocation6], 0
    %12 = vsyncpa [#allocation4], 0
    %s13 = scalar_lea.sflag [#allocation4], 1
    %14 = vsyncpa %s13, 0
    loop: start=0, step=1, limit=4
    $region2: #{tpu_custom_call.1} parent=1 // loop_pre_header
      _
    $region3: #{tpu_custom_call.1} parent=1 // loop_header
      %s16 = sphi 0, %s20
      %p17 = scmp.ge.s32.totalorder %s16, 4
      %s26 = sphi 0, %s28
      %s29 = sphi 0, %s26
      %s30 = sphi 0, %s29
      %s46 = sphi 0, %s30
      %s50 = sphi 0, %s50
      %s52 = sphi 0, %s50
      %s53 = sphi 0, %s52
      %s67 = sphi 0, %s53
      %s71 = sphi 0, %s71
      %s73 = sphi 0, %s71
      %s74 = sphi 0, %s73
      %s88 = sphi 0, %s74
      %s94 = sphi 0, %s96
      %s97 = sphi 0, %s94
      %s98 = sphi 0, %s97
      %s114 = sphi 0, %s98
    $region4: #{tpu_custom_call.1} parent=1 // loop_header_branch
      %19 = sbr.rel (%p17) target = $region8
    $region5: #{tpu_custom_call.1} parent=1 // loop_body
      %s21 = ssub.s32 %s16, 1
      %s22 = ssub.s32 %s16, 2
      %s23 = sadd.s32 %s16, 1
      %s24 = ssub.s32 %s16, %s23
      %p25 = scmp.eq.s32.totalorder %s24, 0
      %s27 = sadd.s32 %s26, 1
      %s28 = scalar_select %p25, %s26, %s27
      %p31 = pneg %p25
      %p32 = scmp.eq.s32.totalorder %s16, 1
      %p33 = por %p31, %p32
      %p34 = scmp.ne.s32.totalorder %s26, %s29
      %p35 = scmp.eq.s32.totalorder %s16, 0
      %p36 = por %p34, %p35
      %p37 = scmp.ne.s32.totalorder %s26, %s29
      %p38 = scmp.eq.s32.totalorder %s21, 1
      %p39 = por %p37, %p38
      %p40 = scmp.ne.s32.totalorder %s29, %s30
      %p41 = scmp.eq.s32.totalorder %s21, 0
      %p42 = por %p40, %p41
      %p43 = scmp.ne.s32.totalorder %s29, %s30
      %p44 = scmp.eq.s32.totalorder %s22, 1
      %p45 = por %p43, %p44
      %p47 = scmp.ne.s32.totalorder %s30, %s46
      %p48 = scmp.eq.s32.totalorder %s22, 0
      %p49 = por %p47, %p48
      %s51 = sadd.s32 %s50, 1
      %p54 = scmp.eq.s32.totalorder %s16, 1
      %p55 = scmp.ne.s32.totalorder %s50, %s52
      %p56 = scmp.eq.s32.totalorder %s16, 0
      %p57 = por %p55, %p56
      %p58 = scmp.ne.s32.totalorder %s50, %s52
      %p59 = scmp.eq.s32.totalorder %s21, 1
      %p60 = por %p58, %p59
      %p61 = scmp.ne.s32.totalorder %s52, %s53
      %p62 = scmp.eq.s32.totalorder %s21, 0
      %p63 = por %p61, %p62
      %p64 = scmp.ne.s32.totalorder %s52, %s53
      %p65 = scmp.eq.s32.totalorder %s22, 1
      %p66 = por %p64, %p65
      %p68 = scmp.ne.s32.totalorder %s53, %s67
      %p69 = scmp.eq.s32.totalorder %s22, 0
      %p70 = por %p68, %p69
      %s72 = sadd.s32 %s71, 1
      %p75 = scmp.eq.s32.totalorder %s16, 1
      %p76 = scmp.ne.s32.totalorder %s71, %s73
      %p77 = scmp.eq.s32.totalorder %s16, 0
      %p78 = por %p76, %p77
      %p79 = scmp.ne.s32.totalorder %s71, %s73
      %p80 = scmp.eq.s32.totalorder %s21, 1
      %p81 = por %p79, %p80
      %p82 = scmp.ne.s32.totalorder %s73, %s74
      %p83 = scmp.eq.s32.totalorder %s21, 0
      %p84 = por %p82, %p83
      %p85 = scmp.ne.s32.totalorder %s73, %s74
      %p86 = scmp.eq.s32.totalorder %s22, 1
      %p87 = por %p85, %p86
      %p89 = scmp.ne.s32.totalorder %s74, %s88
      %p90 = scmp.eq.s32.totalorder %s22, 0
      %p91 = por %p89, %p90
      %s92 = ssub.s32 %s16, %s23
      %p93 = scmp.eq.s32.totalorder %s92, 0
      %s95 = sadd.s32 %s94, 1
      %s96 = scalar_select %p93, %s94, %s95
      %p99 = pneg %p93
      %p100 = scmp.eq.s32.totalorder %s16, 1
      %p101 = por %p99, %p100
      %p102 = scmp.ne.s32.totalorder %s94, %s97
      %p103 = scmp.eq.s32.totalorder %s16, 0
      %p104 = por %p102, %p103
      %p105 = scmp.ne.s32.totalorder %s94, %s97
      %p106 = scmp.eq.s32.totalorder %s21, 1
      %p107 = por %p105, %p106
      %p108 = scmp.ne.s32.totalorder %s97, %s98
      %p109 = scmp.eq.s32.totalorder %s21, 0
      %p110 = por %p108, %p109
      %p111 = scmp.ne.s32.totalorder %s97, %s98
      %p112 = scmp.eq.s32.totalorder %s22, 1
      %p113 = por %p111, %p112
      %p115 = scmp.ne.s32.totalorder %s98, %s114
      %p116 = scmp.eq.s32.totalorder %s22, 0
      %p117 = por %p115, %p116
      %p118 = scmp.le.s32.totalorder 1, %s16
      %p119 = scmp.lt.s32.totalorder %s16, 3
      %p120 = pnand %p118, %p119
      %p121 = pneg %p120
      // Predicated region
      $region9: #{tpu_custom_call.1} parent=5 // pred_check
        _
      $region10: #{tpu_custom_call.1} parent=5 // pred_check_branch
        %123 = sbr.rel (%p120) target = $region12
      $region11: #{tpu_custom_call.1} parent=5 // pred_region
        %s124 = ssub.s32 %s16, 1
        // Predicated region
        $region13: #{tpu_custom_call.1} parent=11 // pred_check
          %p125 = pneg %p63
        $region14: #{tpu_custom_call.1} parent=11 // pred_check_branch
          %127 = sbr.rel (%p125) target = $region16
        $region15: #{tpu_custom_call.1} parent=11 // pred_region
          %s129 = ssub.s32 64, 64
          %130 = vsyncadd [#allocation6], %s129
          %s132 = sshll.u32 [#allocation5], 4
          %s133 = int_to_ptr.vmem [resolvable:$true] %s132
          %135 = dma.hbm_to_vmem [thread:$0]  %s1, 64, %s133, [#allocation6]
        $region16: #{tpu_custom_call.1} parent=11 // pred_fallthru
          _
        // Predicated region
        $region17: #{tpu_custom_call.1} parent=11 // pred_check
          %p136 = pneg %p84
        $region18: #{tpu_custom_call.1} parent=11 // pred_check_branch
          %138 = sbr.rel (%p136) target = $region20
        $region19: #{tpu_custom_call.1} parent=11 // pred_region
          %s140 = ssub.s32 64, 64
          %141 = vsyncadd [#allocation6], %s140
          %s143 = sshll.u32 [#allocation7], 4
          %s144 = int_to_ptr.vmem [resolvable:$true] %s143
          %146 = dma.hbm_to_vmem [thread:$0]  %s2, 64, %s144, [#allocation6]
        $region20: #{tpu_custom_call.1} parent=11 // pred_fallthru
          _
      $region12: #{tpu_custom_call.1} parent=5 // pred_fallthru
        _
      %p147 = scmp.lt.s32.totalorder %s16, 2
      // Predicated region
      $region21: #{tpu_custom_call.1} parent=5 // pred_check
        %p148 = pneg %p147
      $region22: #{tpu_custom_call.1} parent=5 // pred_check_branch
        %150 = sbr.rel (%p148) target = $region24
      $region23: #{tpu_custom_call.1} parent=5 // pred_region
        // Predicated region
        $region25: #{tpu_custom_call.1} parent=23 // pred_check
          %p151 = pneg %p36
        $region26: #{tpu_custom_call.1} parent=23 // pred_check_branch
          %153 = sbr.rel (%p151) target = $region28
        $region27: #{tpu_custom_call.1} parent=23 // pred_region
          %s154 = sand.u32 %s26, 1
          %s155 = scalar_lea.sflag [#allocation3], %s154
          %s156 = sand.u32 %s26, 1
          %s157 = smul.addr %s156, 8
          %s158 = scalar_lea.vmem [#allocation2], %s157
          %s160 = ssub.s32 128, 128
          %161 = vsyncadd %s155, %s160
          %s162 = smul.addr %s16, 64
          %s163 = scalar_lea.hbm %s0, %s162
          %s164 = sshll.u32 %s158, 4
          %s165 = int_to_ptr.vmem [resolvable:$true] %s164
          %170 = dma.hbm_to_vmem [thread:$0]  %s163, 128, %s165, %s155, 128, 64, 4
        $region28: #{tpu_custom_call.1} parent=23 // pred_fallthru
          _
      $region24: #{tpu_custom_call.1} parent=5 // pred_fallthru
        _
      %p171 = scmp.le.s32.totalorder 1, %s16
      %p172 = scmp.lt.s32.totalorder %s16, 3
      %p173 = pnand %p171, %p172
      %p174 = pneg %p173
      // Predicated region
      $region29: #{tpu_custom_call.1} parent=5 // pred_check
        _
      $region30: #{tpu_custom_call.1} parent=5 // pred_check_branch
        %176 = sbr.rel (%p173) target = $region32
      $region31: #{tpu_custom_call.1} parent=5 // pred_region
        %s177 = ssub.s32 %s16, 1
        %s178 = sand.u32 %s29, 1
        %s179 = scalar_lea.sflag [#allocation3], %s178
        %s180 = sand.u32 %s29, 1
        %s181 = smul.addr %s180, 8
        %s182 = scalar_lea.vmem [#allocation2], %s181
        // Predicated region
        $region33: #{tpu_custom_call.1} parent=31 // pred_check
          %p183 = pneg %p42
        $region34: #{tpu_custom_call.1} parent=31 // pred_check_branch
          %185 = sbr.rel (%p183) target = $region36
        $region35: #{tpu_custom_call.1} parent=31 // pred_region
          %186 = dma.done %s179, 128
        $region36: #{tpu_custom_call.1} parent=31 // pred_fallthru
          _
        // Predicated region
        $region37: #{tpu_custom_call.1} parent=31 // pred_check
          %p187 = pneg %p63
        $region38: #{tpu_custom_call.1} parent=31 // pred_check_branch
          %189 = sbr.rel (%p187) target = $region40
        $region39: #{tpu_custom_call.1} parent=31 // pred_region
          %190 = dma.done [#allocation6], 64
        $region40: #{tpu_custom_call.1} parent=31 // pred_fallthru
          _
        // Predicated region
        $region41: #{tpu_custom_call.1} parent=31 // pred_check
          %p191 = pneg %p84
        $region42: #{tpu_custom_call.1} parent=31 // pred_check_branch
          %193 = sbr.rel (%p191) target = $region44
        $region43: #{tpu_custom_call.1} parent=31 // pred_region
          %194 = dma.done [#allocation6], 64
        $region44: #{tpu_custom_call.1} parent=31 // pred_fallthru
          _
        %s195 = sand.u32 %s29, 1
        %s196 = scalar_lea.sflag [#allocation3], %s195
        %s197 = sand.u32 %s29, 1
        %s198 = smul.addr %s197, 8
        %s199 = scalar_lea.vmem [#allocation2], %s198
        %p200 = pneg %p42
        %p201 = pneg %p39
        %p202 = pneg %p63
        %p203 = pneg %p60
        %p204 = pneg %p84
        %p205 = pneg %p81
        %p206 = pneg %p110
        %p207 = pneg %p107
        %s208 = sand.u32 %s97, 1
        %s209 = scalar_lea.sflag [#allocation4], %s208
        %s210 = sand.u32 %s97, 1
        %s211 = smul.addr %s210, 8
        %s212 = scalar_lea.vmem [#allocation8], %s211
        %v213 = vld [vmem:[%s182] sm:$0xf]
        %v214 = vld [vmem:[%s182 + $0x4] sm:$0xf]
        %v215 = vld [vmem:[#allocation5] sm:$0xf]
        %v216 = vld [vmem:[#allocation7] sm:$0xf]
        %vm217 = vcmask 1043456
        %v218 = vsel %vm217, %v213, 0.0
        %v219 = vrot.slane %v218, 4
        %v220 = vadd.f32 %v218, %v219
        %v221 = vrot.slane %v220, 2
        %v222 = vadd.f32 %v220, %v221
        %v223 = vrot.slane %v222, 1
        %v224 = vadd.f32 %v222, %v223
        %v225 = vsel %vm217, %v214, 0.0
        %v226 = vrot.slane %v225, 4
        %v227 = vadd.f32 %v225, %v226
        %v228 = vrot.slane %v227, 2
        %v229 = vadd.f32 %v227, %v228
        %v230 = vrot.slane %v229, 1
        %v231 = vadd.f32 %v229, %v230
        %v232 = vmul.f32 %v224, 0.25
        %v233 = vmul.f32 %v231, 0.25
        %v234 = vsub.f32 %v213, %v232
        %v235 = vsub.f32 %v214, %v233
        %v236 = vmul.f32 %v234, %v234
        %v237 = vmul.f32 %v235, %v235
        %v238 = vsel %vm217, %v236, 0.0
        %v239 = vrot.slane %v238, 4
        %v240 = vadd.f32 %v238, %v239
        %v241 = vrot.slane %v240, 2
        %v242 = vadd.f32 %v240, %v241
        %v243 = vrot.slane %v242, 1
        %v244 = vadd.f32 %v242, %v243
        %v245 = vsel %vm217, %v237, 0.0
        %v246 = vrot.slane %v245, 4
        %v247 = vadd.f32 %v245, %v246
        %v248 = vrot.slane %v247, 2
        %v249 = vadd.f32 %v247, %v248
        %v250 = vrot.slane %v249, 1
        %v251 = vadd.f32 %v249, %v250
        %v252 = vmul.f32 %v244, 0.25
        %v253 = vmul.f32 %v251, 0.25
        %v254 = vadd.f32 %v252, 1e-05
        %v255 = vadd.f32 %v253, 1e-05
        %v256 = vrsqrt.pop %v254
        %v257 = vrsqrt.pop %v255
        %v258 = vmul.f32 %v234, %v256
        %v259 = vmul.f32 %v235, %v257
        %261 = vset.pattern.permute.xlu0 0
        %262 = vperm.xlu0 %261, %v215
        %v263 = vpop.permute.xlu0 %262
        %v265 = vmul.f32 %v258, %v263
        %v266 = vmul.f32 %v259, %v263
        %268 = vset.pattern.permute.xlu0 0
        %269 = vperm.xlu0 %268, %v216
        %v270 = vpop.permute.xlu0 %269
        %v272 = vadd.f32 %v265, %v270
        %v273 = vadd.f32 %v266, %v270
        %274 = vst [vmem:[%s212] sm:$0xf] %v272
        %275 = vst [vmem:[%s212 + $0x4] sm:$0xf] %v273
        %s276 = sand.u32 %s97, 1
        %s277 = scalar_lea.sflag [#allocation4], %s276
        %s278 = sand.u32 %s97, 1
        %s279 = smul.addr %s278, 8
        %s280 = scalar_lea.vmem [#allocation8], %s279
        // Predicated region
        $region45: #{tpu_custom_call.1} parent=31 // pred_check
          %p281 = pneg %p107
        $region46: #{tpu_custom_call.1} parent=31 // pred_check_branch
          %283 = sbr.rel (%p281) target = $region48
        $region47: #{tpu_custom_call.1} parent=31 // pred_region
          %s285 = ssub.s32 128, 128
          %286 = vsyncadd %s277, %s285
          %s287 = smul.addr %s21, 64
          %s288 = scalar_lea.hbm %s3, %s287
          %s289 = sshll.u32 %s280, 4
          %s290 = int_to_ptr.vmem [resolvable:$true] %s289
          %295 = dma.vmem_to_hbm [thread:$0]  %s290, 128, %s288, %s277, 64, 128, 4
        $region48: #{tpu_custom_call.1} parent=31 // pred_fallthru
          _
      $region32: #{tpu_custom_call.1} parent=5 // pred_fallthru
        _
      %p296 = scmp.le.s32.totalorder 2, %s16
      // Predicated region
      $region49: #{tpu_custom_call.1} parent=5 // pred_check
        %p297 = pneg %p296
      $region50: #{tpu_custom_call.1} parent=5 // pred_check_branch
        %299 = sbr.rel (%p297) target = $region52
      $region51: #{tpu_custom_call.1} parent=5 // pred_region
        %s300 = ssub.s32 %s16, 2
        // Predicated region
        $region53: #{tpu_custom_call.1} parent=51 // pred_check
          %p301 = pneg %p113
        $region54: #{tpu_custom_call.1} parent=51 // pred_check_branch
          %303 = sbr.rel (%p301) target = $region56
        $region55: #{tpu_custom_call.1} parent=51 // pred_region
          %s304 = sand.u32 %s98, 1
          %s305 = scalar_lea.sflag [#allocation4], %s304
          %s306 = sand.u32 %s98, 1
          %s307 = smul.addr %s306, 8
          %s308 = scalar_lea.vmem [#allocation8], %s307
          %309 = dma.done %s305, 128
        $region56: #{tpu_custom_call.1} parent=51 // pred_fallthru
          _
      $region52: #{tpu_custom_call.1} parent=5 // pred_fallthru
        _
    $region6: #{tpu_custom_call.1} parent=1 // loop_footer
      %s20 = sadd.s32 1, %s16
    $region7: #{tpu_custom_call.1} parent=1 // loop_footer_branch
      %15 = sbr.rel target = $region3
    $region8: #{tpu_custom_call.1} parent=1 // loop_exit
      _
    %310 = vsyncpa [#allocation3], 1
    %s311 = scalar_lea.sflag [#allocation3], 1
    %312 = vsyncpa %s311, 1
    %313 = vsyncpa [#allocation6], 1
    %314 = vsyncpa [#allocation4], 1
    %s315 = scalar_lea.sflag [#allocation4], 1
    %316 = vsyncpa %s315, 1

</llo_original>
